<compile_context>
chip_gen: v7x
topology: tpu7x:2x2x1
jax: 0.10.0
libtpu: 0.0.40
codegen_flags: <defaults>
</compile_context>

<pallas_src>
import functools
import math

import jax
import jax.numpy as jnp
import numpy as np
from jax.experimental import pallas as pl
from jax.experimental.pallas import tpu as pltpu


def _round_up(a, b):
    return (a + b - 1) // b * b


def _hinge_forest_fused_linear_kernel(
    x_ref, p_ref, thr_ref, w_ref, wl_ref, b_ref, o_ref, *, depth, num_trees
):
    n_nodes = 2 ** depth - 1
    T = num_trees

    x = x_ref[...]                                            # (Bt, C)
    # Gather-as-matmul: node_vals[b, n*T + t] = x[b, ordinals[t, n]]
    node_vals = jnp.dot(x, p_ref[...],
                        preferred_element_type=jnp.float32)   # (Bt, n_nodes*T)
    # One subtract with a sublane-broadcast of the flattened thresholds.
    margins = node_vals - thr_ref[...]                        # (Bt, n_nodes*T)

    # Per-node quantities computed exactly once (lane-aligned slices).
    gt = [margins[:, n * T:(n + 1) * T] > 0.0 for n in range(n_nodes)]
    am = [jnp.abs(margins[:, n * T:(n + 1) * T]) for n in range(n_nodes)]

    # Prefix-shared traversal: expand level by level.  After `depth` levels
    # each path carries (indicator, min |margin| along path, final node idx).
    paths = [(None, None, 0)]
    for _ in range(depth):
        nxt = []
        for ind, mn, node in paths:
            g = gt[node]
            a = am[node]
            new_mn = a if mn is None else jnp.minimum(mn, a)
            not_g = jnp.logical_not(g)
            ind_l = not_g if ind is None else jnp.logical_and(ind, not_g)
            ind_r = g if ind is None else jnp.logical_and(ind, g)
            nxt.append((ind_l, new_mn, 2 * node + 1))
            nxt.append((ind_r, new_mn, 2 * node + 2))
        paths = nxt

    w = w_ref[...]                                            # (n_leaves, T)
    # Sibling leaves share the same path-min, so fuse them: exactly one leaf
    # indicator is true per (b, t), the rest contribute zero.
    tree_out = None
    for i in range(0, len(paths), 2):
        ind_l, mn, node_l = paths[i]
        ind_r, _, node_r = paths[i + 1]
        leaf_l = node_l - n_nodes
        leaf_r = node_r - n_nodes
        sel_w = (jnp.where(ind_l, w[leaf_l:leaf_l + 1, :], 0.0) +
                 jnp.where(ind_r, w[leaf_r:leaf_r + 1, :], 0.0))
        contrib = mn * sel_w
        tree_out = contrib if tree_out is None else tree_out + contrib

    # Fused linear layer (lane-dense, O padded to a multiple of 128).
    out = jnp.dot(tree_out, wl_ref[...],
                  preferred_element_type=jnp.float32) + b_ref[...]
    o_ref[...] = out.astype(o_ref.dtype)


def prepare_hinge_forest_params(thresholds, ordinals, weights,
                                linear_weights, linear_bias, *, in_channels):
    """One-time (per parameter update) layout prep.  Hoisted out of forward."""
    T, n_nodes = thresholds.shape
    depth = int(round(math.log2(n_nodes + 1)))
    assert 2 ** depth - 1 == n_nodes
    O = linear_weights.shape[0]
    O_pad = _round_up(max(O, 128), 128)          # lane-dense output stores

    onehot = jax.nn.one_hot(ordinals, in_channels, dtype=jnp.float32)  # (T, n_nodes, C)
    p_mat = jnp.transpose(onehot, (2, 1, 0)).reshape(in_channels, n_nodes * T)
    thr_flat = thresholds.T.reshape(1, n_nodes * T)                    # col = n*T + t
    w_lt = weights.T.astype(jnp.float32)                               # (n_leaves, T)
    wl_to = jnp.zeros((T, O_pad), jnp.float32).at[:, :O].set(
        linear_weights.T.astype(jnp.float32))
    bias_pad = jnp.zeros((1, O_pad), jnp.float32).at[:, :O].set(
        linear_bias.reshape(1, O).astype(jnp.float32))

    return dict(p_mat=p_mat, thr_flat=thr_flat, w_lt=w_lt, wl_to=wl_to,
                bias=bias_pad, depth=depth, num_trees=T,
                out_channels=O, out_channels_padded=O_pad,
                in_channels=in_channels)


def hinge_forest_fused_linear_forward(x, params, *, batch_tile=256):
    """Forward pass with pre-prepared params (see prepare_hinge_forest_params)."""
    B, C = x.shape
    assert C == params["in_channels"]
    depth = params["depth"]
    T = params["num_trees"]
    n_nodes = 2 ** depth - 1
    n_leaves = 2 ** depth
    O = params["out_channels"]
    O_pad = params["out_channels_padded"]

    # Batch tiling: pad B instead of asserting; clamp the tile for small B.
    # Note for v7x: keep batch_tile modest (<=256) so intermediates fit its
    # 64 MiB VMEM; v5e/v6e can take 512+ with vmem_limit_bytes raised.
    bt = min(batch_tile, _round_up(B, 8))
    bt = _round_up(bt, 8)
    B_pad = _round_up(B, bt)
    if B_pad != B:
        x = jnp.pad(x, ((0, B_pad - B), (0, 0)))

    grid = (B_pad // bt,)

    flops = 2.0 * B_pad * C * n_nodes * T + 2.0 * B_pad * T * O_pad
    bytes_accessed = 4 * (B_pad * C + C * n_nodes * T + n_nodes * T +
                          n_leaves * T + T * O_pad + O_pad + B_pad * O_pad)
    cost = pl.CostEstimate(flops=int(flops), transcendentals=0,
                           bytes_accessed=int(bytes_accessed))

    kernel = functools.partial(
        _hinge_forest_fused_linear_kernel, depth=depth, num_trees=T)

    out = pl.pallas_call(
        kernel,
        out_shape=jax.ShapeDtypeStruct((B_pad, O_pad), jnp.float32),
        grid_spec=pltpu.PrefetchScalarGridSpec(
            num_scalar_prefetch=0,
            grid=grid,
            in_specs=[
                pl.BlockSpec((bt, C), lambda i: (i, 0)),              # x
                pl.BlockSpec((C, n_nodes * T), lambda i: (0, 0)),     # one-hot gather
                pl.BlockSpec((1, n_nodes * T), lambda i: (0, 0)),     # thresholds (flat)
                pl.BlockSpec((n_leaves, T), lambda i: (0, 0)),        # leaf weights
                pl.BlockSpec((T, O_pad), lambda i: (0, 0)),           # linear weights
                pl.BlockSpec((1, O_pad), lambda i: (0, 0)),           # linear bias
            ],
            out_specs=pl.BlockSpec((bt, O_pad), lambda i: (i, 0)),
        ),
        compiler_params=pltpu.CompilerParams(
            dimension_semantics=("parallel",)),
        cost_estimate=cost,
    )(x, params["p_mat"], params["thr_flat"], params["w_lt"],
      params["wl_to"], params["bias"])

    return out[:B, :O]


def random_hinge_forest_fused_linear(
    x, thresholds, ordinals, weights, linear_weights, linear_bias,
    *, depth, batch_tile=256
):
    """Convenience wrapper: prep params + forward in one call."""
    params = prepare_hinge_forest_params(
        thresholds, ordinals, weights, linear_weights, linear_bias,
        in_channels=x.shape[1])
    assert params["depth"] == depth
    return hinge_forest_fused_linear_forward(x, params, batch_tile=batch_tile)


def reference_forward(x, thresholds, ordinals, weights,
                      linear_weights, linear_bias, depth):
    x = np.asarray(x, np.float64)
    thresholds = np.asarray(thresholds, np.float64)
    ordinals = np.asarray(ordinals)
    weights = np.asarray(weights, np.float64)
    linear_weights = np.asarray(linear_weights, np.float64)
    linear_bias = np.asarray(linear_bias, np.float64)

    B = x.shape[0]
    T = thresholds.shape[0]
    tree_out = np.zeros((B, T), np.float64)
    for b in range(B):
        for t in range(T):
            node = 0
            key = 0
            min_margin = x[b, ordinals[t, 0]] - thresholds[t, 0]
            for _ in range(depth):
                margin = x[b, ordinals[t, node]] - thresholds[t, node]
                bit = 1 if margin > 0 else 0
                if abs(margin) < abs(min_margin):
                    min_margin = margin
                key = 2 * key + bit
                node = 2 * node + 1 + bit
            tree_out[b, t] = weights[t, key] * abs(min_margin)
    return tree_out @ linear_weights.T + linear_bias


if __name__ == "__main__":
    B = 16            # batch (not required to divide the batch tile)
    C = 16            # in_channels
    T = 128           # number_of_trees
    O = 32            # out_channels of the fused linear (padded to 128 inside)
    depth = 3
    n_nodes = 2 ** depth - 1
    n_leaves = 2 ** depth

    key = jax.random.PRNGKey(0)
    k1, k2, k3, k4, k5, k6 = jax.random.split(key, 6)

    x = jax.random.normal(k1, (B, C), jnp.float32)
    # thresholds ~ U(-3, 3), shape [number_of_trees, 2**depth - 1]
    thresholds = 6.0 * jax.random.uniform(k2, (T, n_nodes), jnp.float32) - 3.0
    # ordinals ~ randint(0, in_channels)
    ordinals = jax.random.randint(k3, (T, n_nodes), 0, C, dtype=jnp.int32)
    # leaf weights ~ N(0, 1), shape [number_of_trees, 2**depth]
    weights = jax.random.normal(k4, (T, n_leaves), jnp.float32)
    # kaiming_uniform_(a=sqrt(5)) on [O, T]  =>  U(-1/sqrt(T), 1/sqrt(T))
    bound = 1.0 / math.sqrt(T)
    linear_weights = jax.random.uniform(
        k5, (O, T), jnp.float32, minval=-bound, maxval=bound)
    linear_bias = jax.random.uniform(
        k6, (O,), jnp.float32, minval=-bound, maxval=bound)

    # Param prep hoisted (done once per parameter update in real use).
    params = prepare_hinge_forest_params(
        thresholds, ordinals, weights, linear_weights, linear_bias,
        in_channels=C)

    out = hinge_forest_fused_linear_forward(x, params, batch_tile=256)
    out = jax.block_until_ready(out)

    ref = reference_forward(x, thresholds, ordinals, weights,
                            linear_weights, linear_bias, depth)
    np.testing.assert_allclose(np.asarray(out), ref, rtol=1e-3, atol=1e-3)
    print("KERNEL_OK")
</pallas_src>

<mosaic_0001>
module attributes {stable_mosaic.version = 11 : i64} {
  func.func @_hinge_forest_fused_linear_kernel(%arg0: i32, %arg1: memref<16x16xf32, #tpu.memory_space<vmem>>, %arg2: memref<16x896xf32, #tpu.memory_space<vmem>>, %arg3: memref<1x896xf32, #tpu.memory_space<vmem>>, %arg4: memref<8x128xf32, #tpu.memory_space<vmem>>, %arg5: memref<128x128xf32, #tpu.memory_space<vmem>>, %arg6: memref<1x128xf32, #tpu.memory_space<vmem>>, %arg7: memref<16x128xf32, #tpu.memory_space<vmem>>) attributes {dimension_semantics = [#tpu.dimension_semantics<parallel>], iteration_bounds = array<i64: 1>, scalar_prefetch = 0 : i64, scratch_operands = 0 : i64, tpu.core_type = #tpu.core_type<tc>, window_params = [{transform_indices = @transform_0, window_bounds = array<i64: 16, 16>}, {pipeline_mode = #tpu.pipeline_mode<synchronous>, transform_indices = @transform_1, window_bounds = array<i64: 16, 896>}, {pipeline_mode = #tpu.pipeline_mode<synchronous>, transform_indices = @transform_2, window_bounds = array<i64: 1, 896>}, {pipeline_mode = #tpu.pipeline_mode<synchronous>, transform_indices = @transform_3, window_bounds = array<i64: 8, 128>}, {pipeline_mode = #tpu.pipeline_mode<synchronous>, transform_indices = @transform_4, window_bounds = array<i64: 128, 128>}, {pipeline_mode = #tpu.pipeline_mode<synchronous>, transform_indices = @transform_5, window_bounds = array<i64: 1, 128>}, {transform_indices = @transform_6, window_bounds = array<i64: 16, 128>}]} {
    %c0 = arith.constant 0 : index
    %c0_0 = arith.constant 0 : index
    %0 = vector.load %arg1[%c0, %c0_0] : memref<16x16xf32, #tpu.memory_space<vmem>>, vector<16x16xf32>
    %c0_1 = arith.constant 0 : index
    %c0_2 = arith.constant 0 : index
    %1 = vector.load %arg2[%c0_1, %c0_2] : memref<16x896xf32, #tpu.memory_space<vmem>>, vector<16x896xf32>
    %cst = arith.constant dense<0.000000e+00> : vector<16x896xf32>
    %2 = tpu.matmul %0, %1, %cst {dimension_numbers = #tpu.dot_dimension_numbers<[1], [0], [0], [1], [0, 0, 1, 1], [], []>} : vector<16x16xf32>, vector<16x896xf32>, vector<16x896xf32> -> vector<16x896xf32>
    %c0_3 = arith.constant 0 : index
    %c0_4 = arith.constant 0 : index
    %3 = vector.load %arg3[%c0_3, %c0_4] : memref<1x896xf32, #tpu.memory_space<vmem>>, vector<1x896xf32>
    %4 = vector.broadcast %3 : vector<1x896xf32> to vector<16x896xf32>
    %5 = arith.subf %2, %4 : vector<16x896xf32>
    %6 = vector.extract_strided_slice %5 {offsets = [0, 0], sizes = [16, 128], strides = [1, 1]} : vector<16x896xf32> to vector<16x128xf32>
    %cst_5 = arith.constant 0.000000e+00 : f32
    %7 = vector.broadcast %cst_5 : f32 to vector<16x128xf32>
    %8 = arith.cmpf ogt, %6, %7 : vector<16x128xf32>
    %9 = vector.extract_strided_slice %5 {offsets = [0, 128], sizes = [16, 128], strides = [1, 1]} : vector<16x896xf32> to vector<16x128xf32>
    %cst_6 = arith.constant 0.000000e+00 : f32
    %10 = vector.broadcast %cst_6 : f32 to vector<16x128xf32>
    %11 = arith.cmpf ogt, %9, %10 : vector<16x128xf32>
    %12 = vector.extract_strided_slice %5 {offsets = [0, 256], sizes = [16, 128], strides = [1, 1]} : vector<16x896xf32> to vector<16x128xf32>
    %cst_7 = arith.constant 0.000000e+00 : f32
    %13 = vector.broadcast %cst_7 : f32 to vector<16x128xf32>
    %14 = arith.cmpf ogt, %12, %13 : vector<16x128xf32>
    %15 = vector.extract_strided_slice %5 {offsets = [0, 384], sizes = [16, 128], strides = [1, 1]} : vector<16x896xf32> to vector<16x128xf32>
    %cst_8 = arith.constant 0.000000e+00 : f32
    %16 = vector.broadcast %cst_8 : f32 to vector<16x128xf32>
    %17 = arith.cmpf ogt, %15, %16 : vector<16x128xf32>
    %18 = vector.extract_strided_slice %5 {offsets = [0, 512], sizes = [16, 128], strides = [1, 1]} : vector<16x896xf32> to vector<16x128xf32>
    %cst_9 = arith.constant 0.000000e+00 : f32
    %19 = vector.broadcast %cst_9 : f32 to vector<16x128xf32>
    %20 = arith.cmpf ogt, %18, %19 : vector<16x128xf32>
    %21 = vector.extract_strided_slice %5 {offsets = [0, 640], sizes = [16, 128], strides = [1, 1]} : vector<16x896xf32> to vector<16x128xf32>
    %cst_10 = arith.constant 0.000000e+00 : f32
    %22 = vector.broadcast %cst_10 : f32 to vector<16x128xf32>
    %23 = arith.cmpf ogt, %21, %22 : vector<16x128xf32>
    %24 = vector.extract_strided_slice %5 {offsets = [0, 768], sizes = [16, 128], strides = [1, 1]} : vector<16x896xf32> to vector<16x128xf32>
    %cst_11 = arith.constant 0.000000e+00 : f32
    %25 = vector.broadcast %cst_11 : f32 to vector<16x128xf32>
    %26 = arith.cmpf ogt, %24, %25 : vector<16x128xf32>
    %27 = vector.extract_strided_slice %5 {offsets = [0, 0], sizes = [16, 128], strides = [1, 1]} : vector<16x896xf32> to vector<16x128xf32>
    %28 = math.absf %27 : vector<16x128xf32>
    %29 = vector.extract_strided_slice %5 {offsets = [0, 128], sizes = [16, 128], strides = [1, 1]} : vector<16x896xf32> to vector<16x128xf32>
    %30 = math.absf %29 : vector<16x128xf32>
    %31 = vector.extract_strided_slice %5 {offsets = [0, 256], sizes = [16, 128], strides = [1, 1]} : vector<16x896xf32> to vector<16x128xf32>
    %32 = math.absf %31 : vector<16x128xf32>
    %33 = vector.extract_strided_slice %5 {offsets = [0, 384], sizes = [16, 128], strides = [1, 1]} : vector<16x896xf32> to vector<16x128xf32>
    %34 = math.absf %33 : vector<16x128xf32>
    %35 = vector.extract_strided_slice %5 {offsets = [0, 512], sizes = [16, 128], strides = [1, 1]} : vector<16x896xf32> to vector<16x128xf32>
    %36 = math.absf %35 : vector<16x128xf32>
    %37 = vector.extract_strided_slice %5 {offsets = [0, 640], sizes = [16, 128], strides = [1, 1]} : vector<16x896xf32> to vector<16x128xf32>
    %38 = math.absf %37 : vector<16x128xf32>
    %39 = vector.extract_strided_slice %5 {offsets = [0, 768], sizes = [16, 128], strides = [1, 1]} : vector<16x896xf32> to vector<16x128xf32>
    %40 = math.absf %39 : vector<16x128xf32>
    %cst_12 = arith.constant dense<true> : vector<16x128xi1>
    %41 = arith.xori %8, %cst_12 : vector<16x128xi1>
    %42 = arith.minimumf %28, %30 : vector<16x128xf32>
    %cst_13 = arith.constant dense<true> : vector<16x128xi1>
    %43 = arith.xori %11, %cst_13 : vector<16x128xi1>
    %44 = arith.andi %41, %43 : vector<16x128xi1>
    %45 = arith.andi %41, %11 : vector<16x128xi1>
    %46 = arith.minimumf %28, %32 : vector<16x128xf32>
    %cst_14 = arith.constant dense<true> : vector<16x128xi1>
    %47 = arith.xori %14, %cst_14 : vector<16x128xi1>
    %48 = arith.andi %8, %47 : vector<16x128xi1>
    %49 = arith.andi %8, %14 : vector<16x128xi1>
    %50 = arith.minimumf %42, %34 : vector<16x128xf32>
    %cst_15 = arith.constant dense<true> : vector<16x128xi1>
    %51 = arith.xori %17, %cst_15 : vector<16x128xi1>
    %52 = arith.andi %44, %51 : vector<16x128xi1>
    %53 = arith.andi %44, %17 : vector<16x128xi1>
    %54 = arith.minimumf %42, %36 : vector<16x128xf32>
    %cst_16 = arith.constant dense<true> : vector<16x128xi1>
    %55 = arith.xori %20, %cst_16 : vector<16x128xi1>
    %56 = arith.andi %45, %55 : vector<16x128xi1>
    %57 = arith.andi %45, %20 : vector<16x128xi1>
    %58 = arith.minimumf %46, %38 : vector<16x128xf32>
    %cst_17 = arith.constant dense<true> : vector<16x128xi1>
    %59 = arith.xori %23, %cst_17 : vector<16x128xi1>
    %60 = arith.andi %48, %59 : vector<16x128xi1>
    %61 = arith.andi %48, %23 : vector<16x128xi1>
    %62 = arith.minimumf %46, %40 : vector<16x128xf32>
    %cst_18 = arith.constant dense<true> : vector<16x128xi1>
    %63 = arith.xori %26, %cst_18 : vector<16x128xi1>
    %64 = arith.andi %49, %63 : vector<16x128xi1>
    %65 = arith.andi %49, %26 : vector<16x128xi1>
    %c0_19 = arith.constant 0 : index
    %c0_20 = arith.constant 0 : index
    %66 = vector.load %arg4[%c0_19, %c0_20] : memref<8x128xf32, #tpu.memory_space<vmem>>, vector<8x128xf32>
    %67 = vector.extract_strided_slice %66 {offsets = [0, 0], sizes = [1, 128], strides = [1, 1]} : vector<8x128xf32> to vector<1x128xf32>
    %cst_21 = arith.constant 0.000000e+00 : f32
    %68 = vector.shape_cast %67 : vector<1x128xf32> to vector<1x128xf32>
    %69 = vector.broadcast %68 : vector<1x128xf32> to vector<16x128xf32>
    %70 = vector.broadcast %cst_21 : f32 to vector<16x128xf32>
    %71 = arith.select %52, %69, %70 : vector<16x128xi1>, vector<16x128xf32>
    %72 = vector.extract_strided_slice %66 {offsets = [1, 0], sizes = [1, 128], strides = [1, 1]} : vector<8x128xf32> to vector<1x128xf32>
    %cst_22 = arith.constant 0.000000e+00 : f32
    %73 = vector.shape_cast %72 : vector<1x128xf32> to vector<1x128xf32>
    %74 = vector.broadcast %73 : vector<1x128xf32> to vector<16x128xf32>
    %75 = vector.broadcast %cst_22 : f32 to vector<16x128xf32>
    %76 = arith.select %53, %74, %75 : vector<16x128xi1>, vector<16x128xf32>
    %77 = arith.addf %71, %76 : vector<16x128xf32>
    %78 = arith.mulf %50, %77 : vector<16x128xf32>
    %79 = vector.extract_strided_slice %66 {offsets = [2, 0], sizes = [1, 128], strides = [1, 1]} : vector<8x128xf32> to vector<1x128xf32>
    %cst_23 = arith.constant 0.000000e+00 : f32
    %80 = vector.shape_cast %79 : vector<1x128xf32> to vector<1x128xf32>
    %81 = vector.broadcast %80 : vector<1x128xf32> to vector<16x128xf32>
    %82 = vector.broadcast %cst_23 : f32 to vector<16x128xf32>
    %83 = arith.select %56, %81, %82 : vector<16x128xi1>, vector<16x128xf32>
    %84 = vector.extract_strided_slice %66 {offsets = [3, 0], sizes = [1, 128], strides = [1, 1]} : vector<8x128xf32> to vector<1x128xf32>
    %cst_24 = arith.constant 0.000000e+00 : f32
    %85 = vector.shape_cast %84 : vector<1x128xf32> to vector<1x128xf32>
    %86 = vector.broadcast %85 : vector<1x128xf32> to vector<16x128xf32>
    %87 = vector.broadcast %cst_24 : f32 to vector<16x128xf32>
    %88 = arith.select %57, %86, %87 : vector<16x128xi1>, vector<16x128xf32>
    %89 = arith.addf %83, %88 : vector<16x128xf32>
    %90 = arith.mulf %54, %89 : vector<16x128xf32>
    %91 = arith.addf %78, %90 : vector<16x128xf32>
    %92 = vector.extract_strided_slice %66 {offsets = [4, 0], sizes = [1, 128], strides = [1, 1]} : vector<8x128xf32> to vector<1x128xf32>
    %cst_25 = arith.constant 0.000000e+00 : f32
    %93 = vector.shape_cast %92 : vector<1x128xf32> to vector<1x128xf32>
    %94 = vector.broadcast %93 : vector<1x128xf32> to vector<16x128xf32>
    %95 = vector.broadcast %cst_25 : f32 to vector<16x128xf32>
    %96 = arith.select %60, %94, %95 : vector<16x128xi1>, vector<16x128xf32>
    %97 = vector.extract_strided_slice %66 {offsets = [5, 0], sizes = [1, 128], strides = [1, 1]} : vector<8x128xf32> to vector<1x128xf32>
    %cst_26 = arith.constant 0.000000e+00 : f32
    %98 = vector.shape_cast %97 : vector<1x128xf32> to vector<1x128xf32>
    %99 = vector.broadcast %98 : vector<1x128xf32> to vector<16x128xf32>
    %100 = vector.broadcast %cst_26 : f32 to vector<16x128xf32>
    %101 = arith.select %61, %99, %100 : vector<16x128xi1>, vector<16x128xf32>
    %102 = arith.addf %96, %101 : vector<16x128xf32>
    %103 = arith.mulf %58, %102 : vector<16x128xf32>
    %104 = arith.addf %91, %103 : vector<16x128xf32>
    %105 = vector.extract_strided_slice %66 {offsets = [6, 0], sizes = [1, 128], strides = [1, 1]} : vector<8x128xf32> to vector<1x128xf32>
    %cst_27 = arith.constant 0.000000e+00 : f32
    %106 = vector.shape_cast %105 : vector<1x128xf32> to vector<1x128xf32>
    %107 = vector.broadcast %106 : vector<1x128xf32> to vector<16x128xf32>
    %108 = vector.broadcast %cst_27 : f32 to vector<16x128xf32>
    %109 = arith.select %64, %107, %108 : vector<16x128xi1>, vector<16x128xf32>
    %110 = vector.extract_strided_slice %66 {offsets = [7, 0], sizes = [1, 128], strides = [1, 1]} : vector<8x128xf32> to vector<1x128xf32>
    %cst_28 = arith.constant 0.000000e+00 : f32
    %111 = vector.shape_cast %110 : vector<1x128xf32> to vector<1x128xf32>
    %112 = vector.broadcast %111 : vector<1x128xf32> to vector<16x128xf32>
    %113 = vector.broadcast %cst_28 : f32 to vector<16x128xf32>
    %114 = arith.select %65, %112, %113 : vector<16x128xi1>, vector<16x128xf32>
    %115 = arith.addf %109, %114 : vector<16x128xf32>
    %116 = arith.mulf %62, %115 : vector<16x128xf32>
    %117 = arith.addf %104, %116 : vector<16x128xf32>
    %c0_29 = arith.constant 0 : index
    %c0_30 = arith.constant 0 : index
    %118 = vector.load %arg5[%c0_29, %c0_30] : memref<128x128xf32, #tpu.memory_space<vmem>>, vector<128x128xf32>
    %cst_31 = arith.constant dense<0.000000e+00> : vector<16x128xf32>
    %119 = tpu.matmul %117, %118, %cst_31 {dimension_numbers = #tpu.dot_dimension_numbers<[1], [0], [0], [1], [0, 0, 1, 1], [], []>} : vector<16x128xf32>, vector<128x128xf32>, vector<16x128xf32> -> vector<16x128xf32>
    %c0_32 = arith.constant 0 : index
    %c0_33 = arith.constant 0 : index
    %120 = vector.load %arg6[%c0_32, %c0_33] : memref<1x128xf32, #tpu.memory_space<vmem>>, vector<1x128xf32>
    %121 = vector.broadcast %120 : vector<1x128xf32> to vector<16x128xf32>
    %122 = arith.addf %119, %121 : vector<16x128xf32>
    %c0_34 = arith.constant 0 : index
    %c0_35 = arith.constant 0 : index
    %123 = vector.load %arg7[%c0_34, %c0_35] : memref<16x128xf32, #tpu.memory_space<vmem>>, vector<16x128xf32>
    tpu.vector_store %arg7[%c0_34, %c0_35], %122 {strides = array<i32>} : memref<16x128xf32, #tpu.memory_space<vmem>>, vector<16x128xf32>,
    return
  }
  func.func @transform_0(%arg0: i32) -> (i32, i32) {
    %c0_i32 = arith.constant 0 : i32
    %c0_i32_0 = arith.constant 0 : i32
    return %arg0, %c0_i32 : i32, i32
  }
  func.func @transform_1(%arg0: i32) -> (i32, i32) {
    %c0_i32 = arith.constant 0 : i32
    %c0_i32_0 = arith.constant 0 : i32
    %c0_i32_1 = arith.constant 0 : i32
    return %c0_i32, %c0_i32_0 : i32, i32
  }
  func.func @transform_2(%arg0: i32) -> (i32, i32) {
    %c0_i32 = arith.constant 0 : i32
    %c0_i32_0 = arith.constant 0 : i32
    %c0_i32_1 = arith.constant 0 : i32
    return %c0_i32, %c0_i32_0 : i32, i32
  }
  func.func @transform_3(%arg0: i32) -> (i32, i32) {
    %c0_i32 = arith.constant 0 : i32
    %c0_i32_0 = arith.constant 0 : i32
    %c0_i32_1 = arith.constant 0 : i32
    return %c0_i32, %c0_i32_0 : i32, i32
  }
  func.func @transform_4(%arg0: i32) -> (i32, i32) {
    %c0_i32 = arith.constant 0 : i32
    %c0_i32_0 = arith.constant 0 : i32
    %c0_i32_1 = arith.constant 0 : i32
    return %c0_i32, %c0_i32_0 : i32, i32
  }
  func.func @transform_5(%arg0: i32) -> (i32, i32) {
    %c0_i32 = arith.constant 0 : i32
    %c0_i32_0 = arith.constant 0 : i32
    %c0_i32_1 = arith.constant 0 : i32
    return %c0_i32, %c0_i32_0 : i32, i32
  }
  func.func @transform_6(%arg0: i32) -> (i32, i32) {
    %c0_i32 = arith.constant 0 : i32
    %c0_i32_0 = arith.constant 0 : i32
    return %arg0, %c0_i32 : i32, i32
  }
}

</mosaic_0001>

<llo_original>
// kernel: tpu_custom_call.1
$region0: #{tpu_custom_call.1}
  #allocation0 [shape = 'u32[]', space=smem, size = 0x4, offset = 0x4, fixed_abs, tag = 'smem constant byte address 0x4 - core index']
  #allocation1 [shape = 'u32[144,128]{1,0:T(1,128)}', space=vmem, size = 0x12000, scoped, tag = 'internal scratch']
  %s0 = inlined_call_operand.hbm [shape: f32[16,16], index: 0, kind: input, shape index: {}]
  %s1 = inlined_call_operand.hbm [shape: f32[16,896], index: 1, kind: input, shape index: {}]
  %s2 = inlined_call_operand.hbm [shape: f32[1,896], index: 2, kind: input, shape index: {}]
  %s3 = inlined_call_operand.vmem [shape: f32[8,128], index: 3, kind: input, shape index: {}]
  %s4 = inlined_call_operand.hbm [shape: f32[128,128], index: 4, kind: input, shape index: {}]
  %s5 = inlined_call_operand.vmem [shape: f32[1,128], index: 5, kind: input, shape index: {}]
  %s6 = inlined_call_operand.hbm [shape: f32[16,128], index: 6, kind: output, shape index: {}]
  %s7 = sld [smem:[#allocation0]]
  $region50: #{tpu_custom_call.1} parent=0
    _
  %s9 = ssub.s32 1, %s7
  %s10 = scalar_select 0, %s9, %s7
  $region1: #{tpu_custom_call.1} parent=0
    #allocation2 [shape = 'u8[8192]{0}', space=vmem, size = 0x2000, scoped, tag = 'input window, operand 0, single buffered']
    #allocation3 [shape = 's32[1]{0}', space=sflag, size = 0x4, scoped, tag = 'scoped memory for tpu_custom_call.1']
    #allocation4 [shape = 's32[1]{0}', space=sflag, size = 0x4, scoped, tag = 'scoped memory for tpu_custom_call.1']
    #allocation5 [shape = 'u8[57344]{0}', space=vmem, size = 0xe000, scoped, tag = 'input window, operand 1, single buffered']
    #allocation6 [shape = 's32[1]{0}', space=sflag, size = 0x4, scoped, tag = 'scoped memory for tpu_custom_call.1']
    #allocation7 [shape = 'u8[3584]{0}', space=vmem, size = 0x1000, scoped, tag = 'input window, operand 2, single buffered']
    #allocation8 [shape = 'u8[65536]{0}', space=vmem, size = 0x10000, scoped, tag = 'input window, operand 4, single buffered']
    #allocation9 [shape = 's32[1]{0}', space=sflag, size = 0x4, scoped, tag = 'scoped memory for tpu_custom_call.1']
    #allocation10 [shape = 'u8[8192]{0}', space=vmem, size = 0x2000, scoped, tag = 'output window, operand 0, single buffered']
    %11 = vsyncpa [#allocation3], 0
    %12 = vsyncpa [#allocation6], 0
    %13 = vsyncpa [#allocation9], 0
    %14 = vsyncpa [#allocation4], 0
    // Predicated region
    $region2: #{tpu_custom_call.1} parent=1 // pred_check
      _
    $region3: #{tpu_custom_call.1} parent=1 // pred_check_branch
      %16 = sbr.rel (0) target = $region5
    $region4: #{tpu_custom_call.1} parent=1 // pred_region
      %s18 = ssub.s32 256, 256
      %19 = vsyncadd [#allocation3], %s18
      %s20 = sshll.u32 [#allocation2], 4
      %s21 = int_to_ptr.vmem [resolvable:$true] %s20
      %26 = dma.hbm_to_vmem [thread:$0]  %s0, 256, %s21, [#allocation3], 128, 128, 8
    $region5: #{tpu_custom_call.1} parent=1 // pred_fallthru
      _
    // Predicated region
    $region6: #{tpu_custom_call.1} parent=1 // pred_check
      _
    $region7: #{tpu_custom_call.1} parent=1 // pred_check_branch
      %28 = sbr.rel (0) target = $region9
    $region8: #{tpu_custom_call.1} parent=1 // pred_region
      %s30 = ssub.s32 1792, 1792
      %31 = vsyncadd [#allocation6], %s30
      %s32 = sshll.u32 [#allocation5], 4
      %s33 = int_to_ptr.vmem [resolvable:$true] %s32
      %38 = dma.hbm_to_vmem [thread:$0]  %s1, 1792, %s33, [#allocation6], 896, 896, 56
    $region9: #{tpu_custom_call.1} parent=1 // pred_fallthru
      _
    // Predicated region
    $region10: #{tpu_custom_call.1} parent=1 // pred_check
      _
    $region11: #{tpu_custom_call.1} parent=1 // pred_check_branch
      %40 = sbr.rel (0) target = $region13
    $region12: #{tpu_custom_call.1} parent=1 // pred_region
      %s42 = ssub.s32 112, 112
      %43 = vsyncadd [#allocation6], %s42
      %s45 = sshll.u32 [#allocation7], 4
      %s46 = int_to_ptr.vmem [resolvable:$true] %s45
      %48 = dma.hbm_to_vmem [thread:$0]  %s2, 112, %s46, [#allocation6]
    $region13: #{tpu_custom_call.1} parent=1 // pred_fallthru
      _
    // Predicated region
    $region14: #{tpu_custom_call.1} parent=1 // pred_check
      _
    $region15: #{tpu_custom_call.1} parent=1 // pred_check_branch
      %50 = sbr.rel (0) target = $region17
    $region16: #{tpu_custom_call.1} parent=1 // pred_region
      _
    $region17: #{tpu_custom_call.1} parent=1 // pred_fallthru
      _
    // Predicated region
    $region18: #{tpu_custom_call.1} parent=1 // pred_check
      _
    $region19: #{tpu_custom_call.1} parent=1 // pred_check_branch
      %52 = sbr.rel (0) target = $region21
    $region20: #{tpu_custom_call.1} parent=1 // pred_region
      %s54 = ssub.s32 2048, 2048
      %55 = vsyncadd [#allocation9], %s54
      %s56 = sshll.u32 [#allocation8], 4
      %s57 = int_to_ptr.vmem [resolvable:$true] %s56
      %62 = dma.hbm_to_vmem [thread:$0]  %s4, 2048, %s57, [#allocation9], 128, 128, 8
    $region21: #{tpu_custom_call.1} parent=1 // pred_fallthru
      _
    // Predicated region
    $region22: #{tpu_custom_call.1} parent=1 // pred_check
      _
    $region23: #{tpu_custom_call.1} parent=1 // pred_check_branch
      %64 = sbr.rel (0) target = $region25
    $region24: #{tpu_custom_call.1} parent=1 // pred_region
      _
    $region25: #{tpu_custom_call.1} parent=1 // pred_fallthru
      _
    // Predicated region
    $region26: #{tpu_custom_call.1} parent=1 // pred_check
      _
    $region27: #{tpu_custom_call.1} parent=1 // pred_check_branch
      %66 = sbr.rel (0) target = $region29
    $region28: #{tpu_custom_call.1} parent=1 // pred_region
      %67 = dma.done [#allocation3], 256
    $region29: #{tpu_custom_call.1} parent=1 // pred_fallthru
      _
    // Predicated region
    $region30: #{tpu_custom_call.1} parent=1 // pred_check
      _
    $region31: #{tpu_custom_call.1} parent=1 // pred_check_branch
      %69 = sbr.rel (0) target = $region33
    $region32: #{tpu_custom_call.1} parent=1 // pred_region
      %70 = dma.done [#allocation6], 1792
    $region33: #{tpu_custom_call.1} parent=1 // pred_fallthru
      _
    // Predicated region
    $region34: #{tpu_custom_call.1} parent=1 // pred_check
      _
    $region35: #{tpu_custom_call.1} parent=1 // pred_check_branch
      %72 = sbr.rel (0) target = $region37
    $region36: #{tpu_custom_call.1} parent=1 // pred_region
      %73 = dma.done [#allocation6], 112
    $region37: #{tpu_custom_call.1} parent=1 // pred_fallthru
      _
    // Predicated region
    $region38: #{tpu_custom_call.1} parent=1 // pred_check
      _
    $region39: #{tpu_custom_call.1} parent=1 // pred_check_branch
      %75 = sbr.rel (0) target = $region41
    $region40: #{tpu_custom_call.1} parent=1 // pred_region
      %76 = dma.done [#allocation9], 2048
    $region41: #{tpu_custom_call.1} parent=1 // pred_fallthru
      _
    %v77 = vld [vmem:[#allocation2] sm:$0xff]
    %v78 = vld [vmem:[#allocation2 + $0x8] sm:$0xff]
    %v79 = vld [vmem:[#allocation5] sm:$0xff]
    %v80 = vld [vmem:[#allocation5 + $0x8] sm:$0xff]
    %v81 = vld [vmem:[#allocation5 + $0x10] sm:$0xff]
    %v82 = vld [vmem:[#allocation5 + $0x18] sm:$0xff]
    %v83 = vld [vmem:[#allocation5 + $0x20] sm:$0xff]
    %v84 = vld [vmem:[#allocation5 + $0x28] sm:$0xff]
    %v85 = vld [vmem:[#allocation5 + $0x30] sm:$0xff]
    %v86 = vld [vmem:[#allocation5 + $0x38] sm:$0xff]
    %v87 = vld [vmem:[#allocation5 + $0x40] sm:$0xff]
    %v88 = vld [vmem:[#allocation5 + $0x48] sm:$0xff]
    %v89 = vld [vmem:[#allocation5 + $0x50] sm:$0xff]
    %v90 = vld [vmem:[#allocation5 + $0x58] sm:$0xff]
    %v91 = vld [vmem:[#allocation5 + $0x60] sm:$0xff]
    %v92 = vld [vmem:[#allocation5 + $0x68] sm:$0xff]
    %vm93 = vcmask 130048
    %v95 = vsel %vm93, %v77, 0
    %v98 = vsel %vm93, %v78, 0
    %100 = vmatprep.subr.mxu0 %v80
    %101 = vmatpush1.msra.mxu0 %v79
    %102 = vmatprep.subr.mxu0 %v87
    %103 = vmatpush1.msra.mxu0 %v86
    %104 = vmatprep.subr.mxu0 0.0
    %105 = vmatpush1.msra.mxu0 0.0
    %106 = vmatprep.subr.mxu0 0.0
    %107 = vmatpush1.msra.mxu0 0.0
    %108 = vmatprep.subr.mxu0 0.0
    %109 = vmatpush1.msra.mxu0 0.0
    %110 = vmatprep.subr.mxu0 0.0
    %111 = vmatpush1.msra.mxu0 0.0
    %112 = vmatprep.subr.mxu0 0.0
    %113 = vmatpush1.msra.mxu0 0.0
    %114 = vmatprep.subr.mxu0 0.0
    %115 = vmatpush1.msra.mxu0 0.0
    %116 = vmatprep.subr.mxu0 0.0
    %117 = vmatpush1.msra.mxu0 0.0
    %118 = vmatprep.subr.mxu0 0.0
    %119 = vmatpush1.msra.mxu0 0.0
    %120 = vmatprep.subr.mxu0 0.0
    %121 = vmatpush1.msra.mxu0 0.0
    %122 = vmatprep.subr.mxu0 0.0
    %123 = vmatpush1.msra.mxu0 0.0
    %124 = vmatprep.subr.mxu0 0.0
    %125 = vmatpush1.msra.mxu0 0.0
    %126 = vmatprep.subr.mxu0 0.0
    %127 = vmatpush1.msra.mxu0 0.0
    %128 = vmatprep.subr.mxu0 0.0
    %129 = vmatpush1.msra.mxu0 0.0
    %130 = vmatprep.subr.mxu0 0.0
    %131 = vmatpush1.msra.mxu0 0.0
    %132 = vmatprep.subr.mxu0 0.0
    %133 = vmatpush1.msra.mxu0 0.0
    %134 = vmatprep.subr.mxu0 0.0
    %135 = vmatpush1.msra.mxu0 0.0
    %136 = vmatprep.subr.mxu0 0.0
    %137 = vmatpush1.msra.mxu0 0.0
    %138 = vmatprep.subr.mxu0 0.0
    %139 = vmatpush1.msra.mxu0 0.0
    %140 = vmatprep.subr.mxu0 0.0
    %141 = vmatpush1.msra.mxu0 0.0
    %142 = vmatprep.subr.mxu0 0.0
    %143 = vmatpush1.msra.mxu0 0.0
    %144 = vmatprep.subr.mxu0 0.0
    %145 = vmatpush1.msra.mxu0 0.0
    %146 = vmatprep.subr.mxu0 0.0
    %147 = vmatpush1.msra.mxu0 0.0
    %148 = vmatprep.subr.mxu0 0.0
    %149 = vmatpush1.msra.mxu0 0.0
    %150 = vmatprep.subr.mxu0 0.0
    %151 = vmatpush1.msra.mxu0 0.0
    %152 = vmatprep.subr.mxu0 0.0
    %153 = vmatpush1.msra.mxu0 0.0
    %154 = vmatprep.subr.mxu0 0.0
    %155 = vmatpush1.msra.mxu0 0.0
    %156 = vmatprep.subr.mxu0 0.0
    %157 = vmatpush1.msra.mxu0 0.0
    %158 = vmatprep.subr.mxu0 0.0
    %159 = vmatpush1.msra.mxu0 0.0
    %160 = vmatprep.subr.mxu0 0.0
    %161 = vmatpush1.msra.mxu0 0.0
    %162 = vmatprep.subr.mxu0 0.0
    %163 = vmatpush1.msra.mxu0 0.0
    %164 = vmatprep.mubr.f32.mxu0 0.0
    %165 = vmatmul.mubr.f32.gmra.mrb[0].mxu0 %v95
    %v166 = vpop.f32.mrb[0].mxu0
    %v167 = vadd.f32 0.0, %v166
    %v168 = vpop.f32.mrb[0].mxu0
    %v169 = vadd.f32 0.0, %v168
    %170 = vmatprep.mubr.f32.mxu0 0.0
    %171 = vmatmul.mubr.f32.gmra.mrb[0].mxu0 %v98
    %v172 = vpop.f32.mrb[0].mxu0
    %v173 = vadd.f32 0.0, %v172
    %v174 = vpop.f32.mrb[0].mxu0
    %v175 = vadd.f32 0.0, %v174
    %176 = vdwg.mxu0
    %177 = vmatprep.subr.mxu0 %v82
    %178 = vmatpush1.msra.mxu0 %v81
    %179 = vmatprep.subr.mxu0 %v89
    %180 = vmatpush1.msra.mxu0 %v88
    %181 = vmatprep.subr.mxu0 0.0
    %182 = vmatpush1.msra.mxu0 0.0
    %183 = vmatprep.subr.mxu0 0.0
    %184 = vmatpush1.msra.mxu0 0.0
    %185 = vmatprep.subr.mxu0 0.0
    %186 = vmatpush1.msra.mxu0 0.0
    %187 = vmatprep.subr.mxu0 0.0
    %188 = vmatpush1.msra.mxu0 0.0
    %189 = vmatprep.subr.mxu0 0.0
    %190 = vmatpush1.msra.mxu0 0.0
    %191 = vmatprep.subr.mxu0 0.0
    %192 = vmatpush1.msra.mxu0 0.0
    %193 = vmatprep.subr.mxu0 0.0
    %194 = vmatpush1.msra.mxu0 0.0
    %195 = vmatprep.subr.mxu0 0.0
    %196 = vmatpush1.msra.mxu0 0.0
    %197 = vmatprep.subr.mxu0 0.0
    %198 = vmatpush1.msra.mxu0 0.0
    %199 = vmatprep.subr.mxu0 0.0
    %200 = vmatpush1.msra.mxu0 0.0
    %201 = vmatprep.subr.mxu0 0.0
    %202 = vmatpush1.msra.mxu0 0.0
    %203 = vmatprep.subr.mxu0 0.0
    %204 = vmatpush1.msra.mxu0 0.0
    %205 = vmatprep.subr.mxu0 0.0
    %206 = vmatpush1.msra.mxu0 0.0
    %207 = vmatprep.subr.mxu0 0.0
    %208 = vmatpush1.msra.mxu0 0.0
    %209 = vmatprep.subr.mxu0 0.0
    %210 = vmatpush1.msra.mxu0 0.0
    %211 = vmatprep.subr.mxu0 0.0
    %212 = vmatpush1.msra.mxu0 0.0
    %213 = vmatprep.subr.mxu0 0.0
    %214 = vmatpush1.msra.mxu0 0.0
    %215 = vmatprep.subr.mxu0 0.0
    %216 = vmatpush1.msra.mxu0 0.0
    %217 = vmatprep.subr.mxu0 0.0
    %218 = vmatpush1.msra.mxu0 0.0
    %219 = vmatprep.subr.mxu0 0.0
    %220 = vmatpush1.msra.mxu0 0.0
    %221 = vmatprep.subr.mxu0 0.0
    %222 = vmatpush1.msra.mxu0 0.0
    %223 = vmatprep.subr.mxu0 0.0
    %224 = vmatpush1.msra.mxu0 0.0
    %225 = vmatprep.subr.mxu0 0.0
    %226 = vmatpush1.msra.mxu0 0.0
    %227 = vmatprep.subr.mxu0 0.0
    %228 = vmatpush1.msra.mxu0 0.0
    %229 = vmatprep.subr.mxu0 0.0
    %230 = vmatpush1.msra.mxu0 0.0
    %231 = vmatprep.subr.mxu0 0.0
    %232 = vmatpush1.msra.mxu0 0.0
    %233 = vmatprep.subr.mxu0 0.0
    %234 = vmatpush1.msra.mxu0 0.0
    %235 = vmatprep.subr.mxu0 0.0
    %236 = vmatpush1.msra.mxu0 0.0
    %237 = vmatprep.subr.mxu0 0.0
    %238 = vmatpush1.msra.mxu0 0.0
    %239 = vmatprep.subr.mxu0 0.0
    %240 = vmatpush1.msra.mxu0 0.0
    %241 = vmatprep.mubr.f32.mxu0 0.0
    %242 = vmatmul.mubr.f32.gmra.mrb[0].mxu0 %v95
    %v243 = vpop.f32.mrb[0].mxu0
    %v244 = vadd.f32 0.0, %v243
    %v245 = vpop.f32.mrb[0].mxu0
    %v246 = vadd.f32 0.0, %v245
    %247 = vmatprep.mubr.f32.mxu0 0.0
    %248 = vmatmul.mubr.f32.gmra.mrb[0].mxu0 %v98
    %v249 = vpop.f32.mrb[0].mxu0
    %v250 = vadd.f32 0.0, %v249
    %v251 = vpop.f32.mrb[0].mxu0
    %v252 = vadd.f32 0.0, %v251
    %253 = vdwg.mxu0
    %254 = vmatprep.subr.mxu0 %v84
    %255 = vmatpush1.msra.mxu0 %v83
    %256 = vmatprep.subr.mxu0 %v91
    %257 = vmatpush1.msra.mxu0 %v90
    %258 = vmatprep.subr.mxu0 0.0
    %259 = vmatpush1.msra.mxu0 0.0
    %260 = vmatprep.subr.mxu0 0.0
    %261 = vmatpush1.msra.mxu0 0.0
    %262 = vmatprep.subr.mxu0 0.0
    %263 = vmatpush1.msra.mxu0 0.0
    %264 = vmatprep.subr.mxu0 0.0
    %265 = vmatpush1.msra.mxu0 0.0
    %266 = vmatprep.subr.mxu0 0.0
    %267 = vmatpush1.msra.mxu0 0.0
    %268 = vmatprep.subr.mxu0 0.0
    %269 = vmatpush1.msra.mxu0 0.0
    %270 = vmatprep.subr.mxu0 0.0
    %271 = vmatpush1.msra.mxu0 0.0
    %272 = vmatprep.subr.mxu0 0.0
    %273 = vmatpush1.msra.mxu0 0.0
    %274 = vmatprep.subr.mxu0 0.0
    %275 = vmatpush1.msra.mxu0 0.0
    %276 = vmatprep.subr.mxu0 0.0
    %277 = vmatpush1.msra.mxu0 0.0
    %278 = vmatprep.subr.mxu0 0.0
    %279 = vmatpush1.msra.mxu0 0.0
    %280 = vmatprep.subr.mxu0 0.0
    %281 = vmatpush1.msra.mxu0 0.0
    %282 = vmatprep.subr.mxu0 0.0
    %283 = vmatpush1.msra.mxu0 0.0
    %284 = vmatprep.subr.mxu0 0.0
    %285 = vmatpush1.msra.mxu0 0.0
    %286 = vmatprep.subr.mxu0 0.0
    %287 = vmatpush1.msra.mxu0 0.0
    %288 = vmatprep.subr.mxu0 0.0
    %289 = vmatpush1.msra.mxu0 0.0
    %290 = vmatprep.subr.mxu0 0.0
    %291 = vmatpush1.msra.mxu0 0.0
    %292 = vmatprep.subr.mxu0 0.0
    %293 = vmatpush1.msra.mxu0 0.0
    %294 = vmatprep.subr.mxu0 0.0
    %295 = vmatpush1.msra.mxu0 0.0
    %296 = vmatprep.subr.mxu0 0.0
    %297 = vmatpush1.msra.mxu0 0.0
    %298 = vmatprep.subr.mxu0 0.0
    %299 = vmatpush1.msra.mxu0 0.0
    %300 = vmatprep.subr.mxu0 0.0
    %301 = vmatpush1.msra.mxu0 0.0
    %302 = vmatprep.subr.mxu0 0.0
    %303 = vmatpush1.msra.mxu0 0.0
    %304 = vmatprep.subr.mxu0 0.0
    %305 = vmatpush1.msra.mxu0 0.0
    %306 = vmatprep.subr.mxu0 0.0
    %307 = vmatpush1.msra.mxu0 0.0
    %308 = vmatprep.subr.mxu0 0.0
    %309 = vmatpush1.msra.mxu0 0.0
    %310 = vmatprep.subr.mxu0 0.0
    %311 = vmatpush1.msra.mxu0 0.0
    %312 = vmatprep.subr.mxu0 0.0
    %313 = vmatpush1.msra.mxu0 0.0
    %314 = vmatprep.subr.mxu0 0.0
    %315 = vmatpush1.msra.mxu0 0.0
    %316 = vmatprep.subr.mxu0 0.0
    %317 = vmatpush1.msra.mxu0 0.0
    %318 = vmatprep.mubr.f32.mxu0 0.0
    %319 = vmatmul.mubr.f32.gmra.mrb[0].mxu0 %v95
    %v320 = vpop.f32.mrb[0].mxu0
    %v321 = vadd.f32 0.0, %v320
    %v322 = vpop.f32.mrb[0].mxu0
    %v323 = vadd.f32 0.0, %v322
    %324 = vmatprep.mubr.f32.mxu0 0.0
    %325 = vmatmul.mubr.f32.gmra.mrb[0].mxu0 %v98
    %v326 = vpop.f32.mrb[0].mxu0
    %v327 = vadd.f32 0.0, %v326
    %v328 = vpop.f32.mrb[0].mxu0
    %v329 = vadd.f32 0.0, %v328
    %330 = vdwg.mxu0
    %331 = vmatprep.subr.mxu0 0.0
    %332 = vmatpush1.msra.mxu0 %v85
    %333 = vmatprep.subr.mxu0 0.0
    %334 = vmatpush1.msra.mxu0 %v92
    %335 = vmatprep.subr.mxu0 0.0
    %336 = vmatpush1.msra.mxu0 0.0
    %337 = vmatprep.subr.mxu0 0.0
    %338 = vmatpush1.msra.mxu0 0.0
    %339 = vmatprep.subr.mxu0 0.0
    %340 = vmatpush1.msra.mxu0 0.0
    %341 = vmatprep.subr.mxu0 0.0
    %342 = vmatpush1.msra.mxu0 0.0
    %343 = vmatprep.subr.mxu0 0.0
    %344 = vmatpush1.msra.mxu0 0.0
    %345 = vmatprep.subr.mxu0 0.0
    %346 = vmatpush1.msra.mxu0 0.0
    %347 = vmatprep.subr.mxu0 0.0
    %348 = vmatpush1.msra.mxu0 0.0
    %349 = vmatprep.subr.mxu0 0.0
    %350 = vmatpush1.msra.mxu0 0.0
    %351 = vmatprep.subr.mxu0 0.0
    %352 = vmatpush1.msra.mxu0 0.0
    %353 = vmatprep.subr.mxu0 0.0
    %354 = vmatpush1.msra.mxu0 0.0
    %355 = vmatprep.subr.mxu0 0.0
    %356 = vmatpush1.msra.mxu0 0.0
    %357 = vmatprep.subr.mxu0 0.0
    %358 = vmatpush1.msra.mxu0 0.0
    %359 = vmatprep.subr.mxu0 0.0
    %360 = vmatpush1.msra.mxu0 0.0
    %361 = vmatprep.subr.mxu0 0.0
    %362 = vmatpush1.msra.mxu0 0.0
    %363 = vmatprep.subr.mxu0 0.0
    %364 = vmatpush1.msra.mxu0 0.0
    %365 = vmatprep.subr.mxu0 0.0
    %366 = vmatpush1.msra.mxu0 0.0
    %367 = vmatprep.subr.mxu0 0.0
    %368 = vmatpush1.msra.mxu0 0.0
    %369 = vmatprep.subr.mxu0 0.0
    %370 = vmatpush1.msra.mxu0 0.0
    %371 = vmatprep.subr.mxu0 0.0
    %372 = vmatpush1.msra.mxu0 0.0
    %373 = vmatprep.subr.mxu0 0.0
    %374 = vmatpush1.msra.mxu0 0.0
    %375 = vmatprep.subr.mxu0 0.0
    %376 = vmatpush1.msra.mxu0 0.0
    %377 = vmatprep.subr.mxu0 0.0
    %378 = vmatpush1.msra.mxu0 0.0
    %379 = vmatprep.subr.mxu0 0.0
    %380 = vmatpush1.msra.mxu0 0.0
    %381 = vmatprep.subr.mxu0 0.0
    %382 = vmatpush1.msra.mxu0 0.0
    %383 = vmatprep.subr.mxu0 0.0
    %384 = vmatpush1.msra.mxu0 0.0
    %385 = vmatprep.subr.mxu0 0.0
    %386 = vmatpush1.msra.mxu0 0.0
    %387 = vmatprep.subr.mxu0 0.0
    %388 = vmatpush1.msra.mxu0 0.0
    %389 = vmatprep.subr.mxu0 0.0
    %390 = vmatpush1.msra.mxu0 0.0
    %391 = vmatprep.subr.mxu0 0.0
    %392 = vmatpush1.msra.mxu0 0.0
    %393 = vmatprep.subr.mxu0 0.0
    %394 = vmatpush1.msra.mxu0 0.0
    %395 = vmatprep.mubr.f32.mxu0 0.0
    %396 = vmatmul.mubr.f32.gmra.mrb[0].mxu0 %v95
    %v397 = vpop.f32.mrb[0].mxu0
    %v398 = vadd.f32 0.0, %v397
    %v399 = vpop.f32.mrb[0].mxu0
    %400 = vmatprep.mubr.f32.mxu0 0.0
    %401 = vmatmul.mubr.f32.gmra.mrb[0].mxu0 %v98
    %v402 = vpop.f32.mrb[0].mxu0
    %v403 = vadd.f32 0.0, %v402
    %v404 = vpop.f32.mrb[0].mxu0
    %405 = vdwg.mxu0
    %v406 = vld [vmem:[#allocation7] sm:$0xff]
    %v408 = vlaneseq
    %v409 = vshrl.u32 %v408, 7
    %v410 = vsub.s32 0, %v409
    %v411 = vrot.slane %v406, %v410
    %v412 = vlaneseq
    %v413 = vshrl.u32 %v412, 7
    %v414 = vsub.s32 1, %v413
    %v415 = vrot.slane %v406, %v414
    %v416 = vlaneseq
    %v417 = vshrl.u32 %v416, 7
    %v418 = vsub.s32 2, %v417
    %v419 = vrot.slane %v406, %v418
    %v420 = vlaneseq
    %v421 = vshrl.u32 %v420, 7
    %v422 = vsub.s32 3, %v421
    %v423 = vrot.slane %v406, %v422
    %v424 = vlaneseq
    %v425 = vshrl.u32 %v424, 7
    %v426 = vsub.s32 4, %v425
    %v427 = vrot.slane %v406, %v426
    %v428 = vlaneseq
    %v429 = vshrl.u32 %v428, 7
    %v430 = vsub.s32 5, %v429
    %v431 = vrot.slane %v406, %v430
    %v432 = vlaneseq
    %v433 = vshrl.u32 %v432, 7
    %v434 = vsub.s32 6, %v433
    %v435 = vrot.slane %v406, %v434
    %v443 = vsub.f32 %v167, %v411
    %v444 = vsub.f32 %v169, %v415
    %v445 = vsub.f32 %v244, %v419
    %v446 = vsub.f32 %v246, %v423
    %v447 = vsub.f32 %v321, %v427
    %v448 = vsub.f32 %v323, %v431
    %v449 = vsub.f32 %v398, %v435
    %v450 = vsub.f32 %v173, %v411
    %v451 = vsub.f32 %v175, %v415
    %v452 = vsub.f32 %v250, %v419
    %v453 = vsub.f32 %v252, %v423
    %v454 = vsub.f32 %v327, %v427
    %v455 = vsub.f32 %v329, %v431
    %v456 = vsub.f32 %v403, %v435
    %vm457 = vcmp.gt.f32.partialorder %v443, 0.0
    %vm458 = vcmp.gt.f32.partialorder %v450, 0.0
    %vm459 = vcmp.gt.f32.partialorder %v444, 0.0
    %vm460 = vcmp.gt.f32.partialorder %v451, 0.0
    %vm461 = vcmp.gt.f32.partialorder %v445, 0.0
    %vm462 = vcmp.gt.f32.partialorder %v452, 0.0
    %vm463 = vcmp.gt.f32.partialorder %v446, 0.0
    %vm464 = vcmp.gt.f32.partialorder %v453, 0.0
    %vm465 = vcmp.gt.f32.partialorder %v447, 0.0
    %vm466 = vcmp.gt.f32.partialorder %v454, 0.0
    %vm467 = vcmp.gt.f32.partialorder %v448, 0.0
    %vm468 = vcmp.gt.f32.partialorder %v455, 0.0
    %vm469 = vcmp.gt.f32.partialorder %v449, 0.0
    %vm470 = vcmp.gt.f32.partialorder %v456, 0.0
    %v471 = vand.u32 2147483647, %v443
    %v472 = vand.u32 2147483647, %v450
    %v473 = vand.u32 2147483647, %v444
    %v474 = vand.u32 2147483647, %v451
    %v475 = vand.u32 2147483647, %v445
    %v476 = vand.u32 2147483647, %v452
    %v477 = vand.u32 2147483647, %v446
    %v478 = vand.u32 2147483647, %v453
    %v479 = vand.u32 2147483647, %v447
    %v480 = vand.u32 2147483647, %v454
    %v481 = vand.u32 2147483647, %v448
    %v482 = vand.u32 2147483647, %v455
    %v483 = vand.u32 2147483647, %v449
    %v484 = vand.u32 2147483647, %v456
    %vm485 = vmxor %vm457, 1
    %vm486 = vmxor %vm458, 1
    %v487 = vmin.f32 %v471, %v473
    %v488 = vmin.f32 %v472, %v474
    %vm489 = vmxor %vm459, 1
    %vm490 = vmxor %vm460, 1
    %vm491 = vmand %vm485, %vm489
    %vm492 = vmand %vm486, %vm490
    %vm493 = vmand %vm485, %vm459
    %vm494 = vmand %vm486, %vm460
    %v495 = vmin.f32 %v471, %v475
    %v496 = vmin.f32 %v472, %v476
    %vm497 = vmxor %vm461, 1
    %vm498 = vmxor %vm462, 1
    %vm499 = vmand %vm457, %vm497
    %vm500 = vmand %vm458, %vm498
    %vm501 = vmand %vm457, %vm461
    %vm502 = vmand %vm458, %vm462
    %v503 = vmin.f32 %v487, %v477
    %v504 = vmin.f32 %v488, %v478
    %vm505 = vmxor %vm463, 1
    %vm506 = vmxor %vm464, 1
    %vm507 = vmand %vm491, %vm505
    %vm508 = vmand %vm492, %vm506
    %vm509 = vmand %vm491, %vm463
    %vm510 = vmand %vm492, %vm464
    %v511 = vmin.f32 %v487, %v479
    %v512 = vmin.f32 %v488, %v480
    %vm513 = vmxor %vm465, 1
    %vm514 = vmxor %vm466, 1
    %vm515 = vmand %vm493, %vm513
    %vm516 = vmand %vm494, %vm514
    %vm517 = vmand %vm493, %vm465
    %vm518 = vmand %vm494, %vm466
    %v519 = vmin.f32 %v495, %v481
    %v520 = vmin.f32 %v496, %v482
    %vm521 = vmxor %vm467, 1
    %vm522 = vmxor %vm468, 1
    %vm523 = vmand %vm499, %vm521
    %vm524 = vmand %vm500, %vm522
    %vm525 = vmand %vm499, %vm467
    %vm526 = vmand %vm500, %vm468
    %v527 = vmin.f32 %v495, %v483
    %v528 = vmin.f32 %v496, %v484
    %vm529 = vmxor %vm469, 1
    %vm530 = vmxor %vm470, 1
    %vm531 = vmand %vm501, %vm529
    %vm532 = vmand %vm502, %vm530
    %vm533 = vmand %vm501, %vm469
    %vm534 = vmand %vm502, %vm470
    %v535 = vld [vmem:[%s3] sm:$0xff]
    %v536 = vlaneseq
    %v537 = vshrl.u32 %v536, 7
    %v538 = vsub.s32 0, %v537
    %v539 = vrot.slane %v535, %v538
    %v540 = vsel %vm507, %v539, 0.0
    %v541 = vsel %vm508, %v539, 0.0
    %v542 = vlaneseq
    %v543 = vshrl.u32 %v542, 7
    %v544 = vsub.s32 1, %v543
    %v545 = vrot.slane %v535, %v544
    %v546 = vsel %vm509, %v545, 0.0
    %v547 = vsel %vm510, %v545, 0.0
    %v548 = vadd.f32 %v540, %v546
    %v549 = vadd.f32 %v541, %v547
    %v550 = vmul.f32 %v503, %v548
    %v551 = vmul.f32 %v504, %v549
    %v552 = vlaneseq
    %v553 = vshrl.u32 %v552, 7
    %v554 = vsub.s32 2, %v553
    %v555 = vrot.slane %v535, %v554
    %v556 = vsel %vm515, %v555, 0.0
    %v557 = vsel %vm516, %v555, 0.0
    %v558 = vlaneseq
    %v559 = vshrl.u32 %v558, 7
    %v560 = vsub.s32 3, %v559
    %v561 = vrot.slane %v535, %v560
    %v562 = vsel %vm517, %v561, 0.0
    %v563 = vsel %vm518, %v561, 0.0
    %v564 = vadd.f32 %v556, %v562
    %v565 = vadd.f32 %v557, %v563
    %v566 = vmul.f32 %v511, %v564
    %v567 = vmul.f32 %v512, %v565
    %v568 = vadd.f32 %v550, %v566
    %v569 = vadd.f32 %v551, %v567
    %v570 = vlaneseq
    %v571 = vshrl.u32 %v570, 7
    %v572 = vsub.s32 4, %v571
    %v573 = vrot.slane %v535, %v572
    %v574 = vsel %vm523, %v573, 0.0
    %v575 = vsel %vm524, %v573, 0.0
    %v576 = vlaneseq
    %v577 = vshrl.u32 %v576, 7
    %v578 = vsub.s32 5, %v577
    %v579 = vrot.slane %v535, %v578
    %v580 = vsel %vm525, %v579, 0.0
    %v581 = vsel %vm526, %v579, 0.0
    %v582 = vadd.f32 %v574, %v580
    %v583 = vadd.f32 %v575, %v581
    %v584 = vmul.f32 %v519, %v582
    %v585 = vmul.f32 %v520, %v583
    %v586 = vadd.f32 %v568, %v584
    %v587 = vadd.f32 %v569, %v585
    %v588 = vlaneseq
    %v589 = vshrl.u32 %v588, 7
    %v590 = vsub.s32 6, %v589
    %v591 = vrot.slane %v535, %v590
    %v592 = vsel %vm531, %v591, 0.0
    %v593 = vsel %vm532, %v591, 0.0
    %v594 = vlaneseq
    %v595 = vshrl.u32 %v594, 7
    %v596 = vsub.s32 7, %v595
    %v597 = vrot.slane %v535, %v596
    %v598 = vsel %vm533, %v597, 0.0
    %v599 = vsel %vm534, %v597, 0.0
    %v600 = vadd.f32 %v592, %v598
    %v601 = vadd.f32 %v593, %v599
    %v602 = vmul.f32 %v527, %v600
    %v603 = vmul.f32 %v528, %v601
    %v604 = vadd.f32 %v586, %v602
    %v605 = vadd.f32 %v587, %v603
    %v606 = vld [vmem:[#allocation8] sm:$0xff]
    %v607 = vld [vmem:[#allocation8 + $0x8] sm:$0xff]
    %v608 = vld [vmem:[#allocation8 + $0x10] sm:$0xff]
    %v609 = vld [vmem:[#allocation8 + $0x18] sm:$0xff]
    %v610 = vld [vmem:[#allocation8 + $0x20] sm:$0xff]
    %v611 = vld [vmem:[#allocation8 + $0x28] sm:$0xff]
    %v612 = vld [vmem:[#allocation8 + $0x30] sm:$0xff]
    %v613 = vld [vmem:[#allocation8 + $0x38] sm:$0xff]
    %v614 = vld [vmem:[#allocation8 + $0x40] sm:$0xff]
    %v615 = vld [vmem:[#allocation8 + $0x48] sm:$0xff]
    %v616 = vld [vmem:[#allocation8 + $0x50] sm:$0xff]
    %v617 = vld [vmem:[#allocation8 + $0x58] sm:$0xff]
    %v618 = vld [vmem:[#allocation8 + $0x60] sm:$0xff]
    %v619 = vld [vmem:[#allocation8 + $0x68] sm:$0xff]
    %v620 = vld [vmem:[#allocation8 + $0x70] sm:$0xff]
    %v621 = vld [vmem:[#allocation8 + $0x78] sm:$0xff]
    %v622 = vld [vmem:[%s5] sm:$0x1]
    %v624 = vlaneseq
    %v625 = vshrl.u32 %v624, 7
    %v626 = vsub.s32 0, %v625
    %v627 = vrot.slane %v622, %v626
    %629 = vmatprep.subr.mxu0 0.0
    %630 = vmatpush1.msra.mxu0 %v606
    %631 = vmatprep.subr.mxu0 0.0
    %632 = vmatpush1.msra.mxu0 %v607
    %633 = vmatprep.subr.mxu0 0.0
    %634 = vmatpush1.msra.mxu0 %v608
    %635 = vmatprep.subr.mxu0 0.0
    %636 = vmatpush1.msra.mxu0 %v609
    %637 = vmatprep.subr.mxu0 0.0
    %638 = vmatpush1.msra.mxu0 %v610
    %639 = vmatprep.subr.mxu0 0.0
    %640 = vmatpush1.msra.mxu0 %v611
    %641 = vmatprep.subr.mxu0 0.0
    %642 = vmatpush1.msra.mxu0 %v612
    %643 = vmatprep.subr.mxu0 0.0
    %644 = vmatpush1.msra.mxu0 %v613
    %645 = vmatprep.subr.mxu0 0.0
    %646 = vmatpush1.msra.mxu0 %v614
    %647 = vmatprep.subr.mxu0 0.0
    %648 = vmatpush1.msra.mxu0 %v615
    %649 = vmatprep.subr.mxu0 0.0
    %650 = vmatpush1.msra.mxu0 %v616
    %651 = vmatprep.subr.mxu0 0.0
    %652 = vmatpush1.msra.mxu0 %v617
    %653 = vmatprep.subr.mxu0 0.0
    %654 = vmatpush1.msra.mxu0 %v618
    %655 = vmatprep.subr.mxu0 0.0
    %656 = vmatpush1.msra.mxu0 %v619
    %657 = vmatprep.subr.mxu0 0.0
    %658 = vmatpush1.msra.mxu0 %v620
    %659 = vmatprep.subr.mxu0 0.0
    %660 = vmatpush1.msra.mxu0 %v621
    %661 = vmatprep.subr.mxu0 0.0
    %662 = vmatpush1.msra.mxu0 0.0
    %663 = vmatprep.subr.mxu0 0.0
    %664 = vmatpush1.msra.mxu0 0.0
    %665 = vmatprep.subr.mxu0 0.0
    %666 = vmatpush1.msra.mxu0 0.0
    %667 = vmatprep.subr.mxu0 0.0
    %668 = vmatpush1.msra.mxu0 0.0
    %669 = vmatprep.subr.mxu0 0.0
    %670 = vmatpush1.msra.mxu0 0.0
    %671 = vmatprep.subr.mxu0 0.0
    %672 = vmatpush1.msra.mxu0 0.0
    %673 = vmatprep.subr.mxu0 0.0
    %674 = vmatpush1.msra.mxu0 0.0
    %675 = vmatprep.subr.mxu0 0.0
    %676 = vmatpush1.msra.mxu0 0.0
    %677 = vmatprep.subr.mxu0 0.0
    %678 = vmatpush1.msra.mxu0 0.0
    %679 = vmatprep.subr.mxu0 0.0
    %680 = vmatpush1.msra.mxu0 0.0
    %681 = vmatprep.subr.mxu0 0.0
    %682 = vmatpush1.msra.mxu0 0.0
    %683 = vmatprep.subr.mxu0 0.0
    %684 = vmatpush1.msra.mxu0 0.0
    %685 = vmatprep.subr.mxu0 0.0
    %686 = vmatpush1.msra.mxu0 0.0
    %687 = vmatprep.subr.mxu0 0.0
    %688 = vmatpush1.msra.mxu0 0.0
    %689 = vmatprep.subr.mxu0 0.0
    %690 = vmatpush1.msra.mxu0 0.0
    %691 = vmatprep.subr.mxu0 0.0
    %692 = vmatpush1.msra.mxu0 0.0
    %693 = vmatprep.mubr.f32.mxu0 0.0
    %694 = vmatmul.mubr.f32.gmra.mrb[0].mxu0 %v604
    %v695 = vpop.f32.mrb[0].mxu0
    %v696 = vadd.f32 %v627, %v695
    %v697 = vpop.f32.mrb[0].mxu0
    %698 = vmatprep.mubr.f32.mxu0 0.0
    %699 = vmatmul.mubr.f32.gmra.mrb[0].mxu0 %v605
    %v700 = vpop.f32.mrb[0].mxu0
    %v701 = vadd.f32 %v627, %v700
    %v702 = vpop.f32.mrb[0].mxu0
    %703 = vdwg.mxu0
    %704 = vst [vmem:[#allocation10] sm:$0xff] %v696
    %705 = vst [vmem:[#allocation10 + $0x8] sm:$0xff] %v701
    // Predicated region
    $region42: #{tpu_custom_call.1} parent=1 // pred_check
      _
    $region43: #{tpu_custom_call.1} parent=1 // pred_check_branch
      %707 = sbr.rel (0) target = $region45
    $region44: #{tpu_custom_call.1} parent=1 // pred_region
      %s709 = ssub.s32 256, 256
      %710 = vsyncadd [#allocation4], %s709
      %s711 = sshll.u32 [#allocation10], 4
      %s712 = int_to_ptr.vmem [resolvable:$true] %s711
      %717 = dma.vmem_to_hbm [thread:$0]  %s712, 256, %s6, [#allocation4], 128, 128, 8
    $region45: #{tpu_custom_call.1} parent=1 // pred_fallthru
      _
    // Predicated region
    $region46: #{tpu_custom_call.1} parent=1 // pred_check
      _
    $region47: #{tpu_custom_call.1} parent=1 // pred_check_branch
      %719 = sbr.rel (0) target = $region49
    $region48: #{tpu_custom_call.1} parent=1 // pred_region
      %720 = dma.done [#allocation4], 256
    $region49: #{tpu_custom_call.1} parent=1 // pred_fallthru
      _
    %721 = vsyncpa [#allocation3], 1
    %722 = vsyncpa [#allocation6], 1
    %723 = vsyncpa [#allocation9], 1
    %724 = vsyncpa [#allocation4], 1

</llo_original>
